<compile_context>
chip_gen: v5e
topology: v5e:2x2
jax: 0.10.0
libtpu: 0.0.40
codegen_flags: <defaults>
</compile_context>

<pallas_src>
import jax
import jax.numpy as jnp
from jax.experimental import pallas as pl
from jax.experimental.pallas import tpu as pltpu


def attention_model_kernel(x_ref, w1t_ref, b1_ref, wat_ref, wfct_ref, bfc_ref,
                           out_ref, attw_ref):
    TB, S, F = x_ref.shape
    H = w1t_ref.shape[1]
    A = wat_ref.shape[1]

    # ---- MLP: fold batch into M -> one (TB*S, F) @ (F, H) matmul + ReLU
    x_flat = x_ref[...].reshape(TB * S, F)                       # major-dim merge only
    h_flat = jnp.dot(x_flat, w1t_ref[...],
                     preferred_element_type=jnp.float32)
    h_flat = jnp.maximum(h_flat + b1_ref[...], 0.0)              # (TB*S, H)

    # ---- attention scores: one (TB*S, H) @ (H, A) matmul, then tanh (EUP)
    s_flat = jnp.tanh(jnp.dot(h_flat, wat_ref[...],
                              preferred_element_type=jnp.float32))   # (TB*S, A)

    # ---- softmax over the sequence axis (per batch row), max-subtracted
    s3 = s_flat.reshape(TB, S, A)                                # major-dim split only
    m = jnp.max(s3, axis=1, keepdims=True)                       # (TB, 1, A)
    e = jnp.exp(s3 - m)
    denom = jnp.sum(e, axis=1, keepdims=True)                    # (TB, 1, A)
    w3 = e * pl.reciprocal(denom, approx=False)                  # (TB, S, A)

    # ---- lane-dense attention-weight store: (TB, 1, S*A) slab (S*A = 128)
    attw_ref[...] = jnp.concatenate(
        [w3[:, s:s + 1, :] for s in range(S)], axis=-1
    ).astype(attw_ref.dtype)                                     # (TB, 1, S*A)

    # ---- weighted sum: sum_a(w^T h) == sum_s (sum_a w[s]) * h[s]
    ws = jnp.sum(w3, axis=-1, keepdims=True)                     # (TB, S, 1)
    h3 = h_flat.reshape(TB, S, H)                                # major-dim split only
    attn_out = jnp.sum(ws * h3, axis=1)                          # (TB, H)

    # ---- final Linear(H -> 1)
    out = jnp.dot(attn_out, wfct_ref[...],
                  preferred_element_type=jnp.float32) + bfc_ref[...]
    out_ref[...] = out.astype(out_ref.dtype)                     # (TB, 1)


def attention_model_forward(x, params, tb=None):
    """x: (B, S, F) float32. Returns (output (B, 1), attn_weights (B, S, A))."""
    B, S, F = x.shape
    w1, b1, wa, wfc, bfc = (params["w1"], params["b1"], params["wa"],
                            params["wfc"], params["bfc"])
    H = w1.shape[0]
    A = wa.shape[0]

    # Whole batch per grid step by default (biggest lever at small sizes).
    tb = B if tb is None else tb
    assert B % tb == 0 and (tb == B or tb % 8 == 0), "tb must tile B cleanly"

    # Pre-transpose weights so the kernel only does plain (row x col) matmuls.
    w1t = w1.T                       # (F, H)
    b1r = b1.reshape(1, H)           # (1, H)
    wat = wa.T                       # (H, A)
    wfct = wfc.T                     # (H, 1)
    bfcr = bfc.reshape(1, 1)         # (1, 1)

    out, attw_flat = pl.pallas_call(
        attention_model_kernel,
        out_shape=(
            jax.ShapeDtypeStruct((B, 1), jnp.float32),
            jax.ShapeDtypeStruct((B, 1, S * A), jnp.float32),   # lane-dense slab
        ),
        grid_spec=pltpu.PrefetchScalarGridSpec(
            num_scalar_prefetch=0,
            grid=(B // tb,),
            in_specs=[
                pl.BlockSpec((tb, S, F), lambda b: (b, 0, 0)),
                pl.BlockSpec((F, H), lambda b: (0, 0)),
                pl.BlockSpec((1, H), lambda b: (0, 0)),
                pl.BlockSpec((H, A), lambda b: (0, 0)),
                pl.BlockSpec((H, 1), lambda b: (0, 0)),
                pl.BlockSpec((1, 1), lambda b: (0, 0)),
            ],
            out_specs=[
                pl.BlockSpec((tb, 1), lambda b: (b, 0)),
                pl.BlockSpec((tb, 1, S * A), lambda b: (b, 0, 0)),
            ],
        ),
        compiler_params=pltpu.CompilerParams(
            dimension_semantics=("parallel",)),
    )(x, w1t, b1r, wat, wfct, bfcr)

    attw = attw_flat.reshape(B, S, A)   # free reshape in the XLA wrapper
    return out, attw


def reference_forward(x, params):
    """Pure-JAX reference mirroring the PyTorch module."""
    w1, b1, wa, wfc, bfc = (params["w1"], params["b1"], params["wa"],
                            params["wfc"], params["bfc"])
    h = jnp.maximum(jnp.einsum("bsf,hf->bsh", x, w1) + b1, 0.0)
    scores = jnp.tanh(jnp.einsum("bsh,ah->bsa", h, wa))
    attw = jax.nn.softmax(scores, axis=1)
    weighted = jnp.einsum("bsa,bsh->bah", attw, h)
    attn_out = weighted.sum(axis=1)
    out = attn_out @ wfc.T + bfc
    return out, attw


def make_params(key, num_features, hidden_size, attention_size):
    k1, k2, k3, k4, k5 = jax.random.split(key, 5)

    def xavier(k, shape, gain=1.0):
        fan_in, fan_out = shape[1], shape[0]
        bound = gain * jnp.sqrt(6.0 / (fan_in + fan_out))
        return jax.random.uniform(k, shape, jnp.float32, -bound, bound)

    return {
        "w1": xavier(k1, (hidden_size, num_features)),
        "b1": jax.random.uniform(k2, (hidden_size,), jnp.float32, -0.1, 0.1),
        "wa": xavier(k3, (attention_size, hidden_size), gain=1.414),
        "wfc": xavier(k4, (1, hidden_size)),
        "bfc": jax.random.uniform(k5, (1,), jnp.float32, -0.1, 0.1),
    }


if __name__ == "__main__":
    B, S, F, H, A = 2, 8, 4, 32, 16
    key = jax.random.PRNGKey(0)
    kx, kp = jax.random.split(key)
    x = jax.random.normal(kx, (B, S, F), dtype=jnp.float32)
    params = make_params(kp, F, H, A)

    out, attw = attention_model_forward(x, params)
    out = jax.block_until_ready(out)
    attw = jax.block_until_ready(attw)

    ref_out, ref_attw = reference_forward(x, params)
    assert out.shape == (B, 1) and attw.shape == (B, S, A)
    assert jnp.allclose(out, ref_out, atol=1e-5, rtol=1e-5)
    assert jnp.allclose(attw, ref_attw, atol=1e-5, rtol=1e-5)

    print("KERNEL_OK")
</pallas_src>

<mosaic_0001>
module attributes {stable_mosaic.version = 11 : i64} {
  func.func @attention_model_kernel(%arg0: i32, %arg1: memref<2x8x4xf32, #tpu.memory_space<vmem>>, %arg2: memref<4x32xf32, #tpu.memory_space<vmem>>, %arg3: memref<1x32xf32, #tpu.memory_space<vmem>>, %arg4: memref<32x16xf32, #tpu.memory_space<vmem>>, %arg5: memref<32x1xf32, #tpu.memory_space<vmem>>, %arg6: memref<1x1xf32, #tpu.memory_space<vmem>>, %arg7: memref<2x1xf32, #tpu.memory_space<vmem>>, %arg8: memref<2x1x128xf32, #tpu.memory_space<vmem>>) attributes {dimension_semantics = [#tpu.dimension_semantics<parallel>], iteration_bounds = array<i64: 1>, scalar_prefetch = 0 : i64, scratch_operands = 0 : i64, tpu.core_type = #tpu.core_type<tc>, window_params = [{transform_indices = @transform_0, window_bounds = array<i64: 2, 8, 4>}, {pipeline_mode = #tpu.pipeline_mode<synchronous>, transform_indices = @transform_1, window_bounds = array<i64: 4, 32>}, {pipeline_mode = #tpu.pipeline_mode<synchronous>, transform_indices = @transform_2, window_bounds = array<i64: 1, 32>}, {pipeline_mode = #tpu.pipeline_mode<synchronous>, transform_indices = @transform_3, window_bounds = array<i64: 32, 16>}, {pipeline_mode = #tpu.pipeline_mode<synchronous>, transform_indices = @transform_4, window_bounds = array<i64: 32, 1>}, {pipeline_mode = #tpu.pipeline_mode<synchronous>, transform_indices = @transform_5, window_bounds = array<i64: 1, 1>}, {transform_indices = @transform_6, window_bounds = array<i64: 2, 1>}, {transform_indices = @transform_7, window_bounds = array<i64: 2, 1, 128>}]} {
    %c0 = arith.constant 0 : index
    %c0_0 = arith.constant 0 : index
    %c0_1 = arith.constant 0 : index
    %0 = vector.load %arg1[%c0, %c0_0, %c0_1] : memref<2x8x4xf32, #tpu.memory_space<vmem>>, vector<2x8x4xf32>
    %1 = vector.shape_cast %0 : vector<2x8x4xf32> to vector<16x4xf32>
    %c0_2 = arith.constant 0 : index
    %c0_3 = arith.constant 0 : index
    %2 = vector.load %arg2[%c0_2, %c0_3] : memref<4x32xf32, #tpu.memory_space<vmem>>, vector<4x32xf32>
    %cst = arith.constant dense<0.000000e+00> : vector<16x32xf32>
    %3 = tpu.matmul %1, %2, %cst {dimension_numbers = #tpu.dot_dimension_numbers<[1], [0], [0], [1], [0, 0, 1, 1], [], []>} : vector<16x4xf32>, vector<4x32xf32>, vector<16x32xf32> -> vector<16x32xf32>
    %c0_4 = arith.constant 0 : index
    %c0_5 = arith.constant 0 : index
    %4 = vector.load %arg3[%c0_4, %c0_5] : memref<1x32xf32, #tpu.memory_space<vmem>>, vector<1x32xf32>
    %5 = vector.broadcast %4 : vector<1x32xf32> to vector<16x32xf32>
    %6 = arith.addf %3, %5 : vector<16x32xf32>
    %cst_6 = arith.constant 0.000000e+00 : f32
    %7 = vector.broadcast %cst_6 : f32 to vector<16x32xf32>
    %8 = arith.maximumf %6, %7 : vector<16x32xf32>
    %c0_7 = arith.constant 0 : index
    %c0_8 = arith.constant 0 : index
    %9 = vector.load %arg4[%c0_7, %c0_8] : memref<32x16xf32, #tpu.memory_space<vmem>>, vector<32x16xf32>
    %cst_9 = arith.constant dense<0.000000e+00> : vector<16x16xf32>
    %10 = tpu.matmul %8, %9, %cst_9 {dimension_numbers = #tpu.dot_dimension_numbers<[1], [0], [0], [1], [0, 0, 1, 1], [], []>} : vector<16x32xf32>, vector<32x16xf32>, vector<16x16xf32> -> vector<16x16xf32>
    %11 = math.tanh %10 : vector<16x16xf32>
    %12 = vector.shape_cast %11 : vector<16x16xf32> to vector<2x8x16xf32>
    %cst_10 = arith.constant dense<0xFF800000> : vector<2x16xf32>
    %13 = vector.multi_reduction <maximumf>, %12, %cst_10 [1] : vector<2x8x16xf32> to vector<2x16xf32>
    %14 = vector.shape_cast %13 : vector<2x16xf32> to vector<2x1x16xf32>
    %15 = vector.broadcast %14 : vector<2x1x16xf32> to vector<2x8x16xf32>
    %16 = arith.subf %12, %15 : vector<2x8x16xf32>
    %17 = math.exp %16 : vector<2x8x16xf32>
    %cst_11 = arith.constant dense<0.000000e+00> : vector<2x16xf32>
    %18 = vector.multi_reduction <add>, %17, %cst_11 [1] : vector<2x8x16xf32> to vector<2x16xf32>
    %19 = vector.shape_cast %18 : vector<2x16xf32> to vector<2x1x16xf32>
    %20 = tpu.reciprocal %19 : vector<2x1x16xf32> -> vector<2x1x16xf32>
    %21 = vector.broadcast %20 : vector<2x1x16xf32> to vector<2x8x16xf32>
    %22 = arith.mulf %17, %21 : vector<2x8x16xf32>
    %23 = vector.extract_strided_slice %22 {offsets = [0, 0, 0], sizes = [2, 1, 16], strides = [1, 1, 1]} : vector<2x8x16xf32> to vector<2x1x16xf32>
    %24 = vector.extract_strided_slice %22 {offsets = [0, 1, 0], sizes = [2, 1, 16], strides = [1, 1, 1]} : vector<2x8x16xf32> to vector<2x1x16xf32>
    %25 = vector.extract_strided_slice %22 {offsets = [0, 2, 0], sizes = [2, 1, 16], strides = [1, 1, 1]} : vector<2x8x16xf32> to vector<2x1x16xf32>
    %26 = vector.extract_strided_slice %22 {offsets = [0, 3, 0], sizes = [2, 1, 16], strides = [1, 1, 1]} : vector<2x8x16xf32> to vector<2x1x16xf32>
    %27 = vector.extract_strided_slice %22 {offsets = [0, 4, 0], sizes = [2, 1, 16], strides = [1, 1, 1]} : vector<2x8x16xf32> to vector<2x1x16xf32>
    %28 = vector.extract_strided_slice %22 {offsets = [0, 5, 0], sizes = [2, 1, 16], strides = [1, 1, 1]} : vector<2x8x16xf32> to vector<2x1x16xf32>
    %29 = vector.extract_strided_slice %22 {offsets = [0, 6, 0], sizes = [2, 1, 16], strides = [1, 1, 1]} : vector<2x8x16xf32> to vector<2x1x16xf32>
    %30 = vector.extract_strided_slice %22 {offsets = [0, 7, 0], sizes = [2, 1, 16], strides = [1, 1, 1]} : vector<2x8x16xf32> to vector<2x1x16xf32>
    %31 = tpu.concatenate %23, %24, %25, %26, %27, %28, %29, %30 in 2 : vector<2x1x16xf32>, vector<2x1x16xf32>, vector<2x1x16xf32>, vector<2x1x16xf32>, vector<2x1x16xf32>, vector<2x1x16xf32>, vector<2x1x16xf32>, vector<2x1x16xf32> -> vector<2x1x128xf32>
    %c0_12 = arith.constant 0 : index
    %c0_13 = arith.constant 0 : index
    %c0_14 = arith.constant 0 : index
    %32 = vector.load %arg8[%c0_12, %c0_13, %c0_14] : memref<2x1x128xf32, #tpu.memory_space<vmem>>, vector<2x1x128xf32>
    tpu.vector_store %arg8[%c0_12, %c0_13, %c0_14], %31 {strides = array<i32>} : memref<2x1x128xf32, #tpu.memory_space<vmem>>, vector<2x1x128xf32>,
    %cst_15 = arith.constant dense<0.000000e+00> : vector<2x8xf32>
    %33 = vector.multi_reduction <add>, %22, %cst_15 [2] : vector<2x8x16xf32> to vector<2x8xf32>
    %34 = vector.shape_cast %33 : vector<2x8xf32> to vector<2x8x1xf32>
    %35 = vector.shape_cast %8 : vector<16x32xf32> to vector<2x8x32xf32>
    %36 = vector.broadcast %34 : vector<2x8x1xf32> to vector<2x8x32xf32>
    %37 = arith.mulf %36, %35 : vector<2x8x32xf32>
    %cst_16 = arith.constant dense<0.000000e+00> : vector<2x32xf32>
    %38 = vector.multi_reduction <add>, %37, %cst_16 [1] : vector<2x8x32xf32> to vector<2x32xf32>
    %c0_17 = arith.constant 0 : index
    %c0_18 = arith.constant 0 : index
    %39 = vector.load %arg5[%c0_17, %c0_18] : memref<32x1xf32, #tpu.memory_space<vmem>>, vector<32x1xf32>
    %cst_19 = arith.constant dense<0.000000e+00> : vector<2x1xf32>
    %40 = tpu.matmul %38, %39, %cst_19 {dimension_numbers = #tpu.dot_dimension_numbers<[1], [0], [0], [1], [0, 0, 1, 1], [], []>} : vector<2x32xf32>, vector<32x1xf32>, vector<2x1xf32> -> vector<2x1xf32>
    %c0_20 = arith.constant 0 : index
    %c0_21 = arith.constant 0 : index
    %41 = vector.load %arg6[%c0_20, %c0_21] : memref<1x1xf32, #tpu.memory_space<vmem>>, vector<1x1xf32>
    %42 = vector.broadcast %41 : vector<1x1xf32> to vector<2x1xf32>
    %43 = arith.addf %40, %42 : vector<2x1xf32>
    %c0_22 = arith.constant 0 : index
    %c0_23 = arith.constant 0 : index
    %44 = vector.load %arg7[%c0_22, %c0_23] : memref<2x1xf32, #tpu.memory_space<vmem>>, vector<2x1xf32>
    tpu.vector_store %arg7[%c0_22, %c0_23], %43 {strides = array<i32>} : memref<2x1xf32, #tpu.memory_space<vmem>>, vector<2x1xf32>,
    return
  }
  func.func @transform_0(%arg0: i32) -> (i32, i32, i32) {
    %c0_i32 = arith.constant 0 : i32
    %c0_i32_0 = arith.constant 0 : i32
    %c0_i32_1 = arith.constant 0 : i32
    return %arg0, %c0_i32, %c0_i32_0 : i32, i32, i32
  }
  func.func @transform_1(%arg0: i32) -> (i32, i32) {
    %c0_i32 = arith.constant 0 : i32
    %c0_i32_0 = arith.constant 0 : i32
    %c0_i32_1 = arith.constant 0 : i32
    return %c0_i32, %c0_i32_0 : i32, i32
  }
  func.func @transform_2(%arg0: i32) -> (i32, i32) {
    %c0_i32 = arith.constant 0 : i32
    %c0_i32_0 = arith.constant 0 : i32
    %c0_i32_1 = arith.constant 0 : i32
    return %c0_i32, %c0_i32_0 : i32, i32
  }
  func.func @transform_3(%arg0: i32) -> (i32, i32) {
    %c0_i32 = arith.constant 0 : i32
    %c0_i32_0 = arith.constant 0 : i32
    %c0_i32_1 = arith.constant 0 : i32
    return %c0_i32, %c0_i32_0 : i32, i32
  }
  func.func @transform_4(%arg0: i32) -> (i32, i32) {
    %c0_i32 = arith.constant 0 : i32
    %c0_i32_0 = arith.constant 0 : i32
    %c0_i32_1 = arith.constant 0 : i32
    return %c0_i32, %c0_i32_0 : i32, i32
  }
  func.func @transform_5(%arg0: i32) -> (i32, i32) {
    %c0_i32 = arith.constant 0 : i32
    %c0_i32_0 = arith.constant 0 : i32
    %c0_i32_1 = arith.constant 0 : i32
    return %c0_i32, %c0_i32_0 : i32, i32
  }
  func.func @transform_6(%arg0: i32) -> (i32, i32) {
    %c0_i32 = arith.constant 0 : i32
    %c0_i32_0 = arith.constant 0 : i32
    return %arg0, %c0_i32 : i32, i32
  }
  func.func @transform_7(%arg0: i32) -> (i32, i32, i32) {
    %c0_i32 = arith.constant 0 : i32
    %c0_i32_0 = arith.constant 0 : i32
    %c0_i32_1 = arith.constant 0 : i32
    return %arg0, %c0_i32, %c0_i32_0 : i32, i32, i32
  }
}

</mosaic_0001>

<llo_original>
// kernel: tpu_custom_call.1
$region0: #{tpu_custom_call.1}
  #allocation0 [shape = 'u32[]', space=smem, size = 0x4, offset = 0x4, fixed_abs, tag = 'smem constant byte address 0x4 - core index']
  #allocation1 [shape = 'u32[72,128]{1,0:T(1,128)}', space=vmem, size = 0x9000, scoped, tag = 'internal scratch']
  #allocation2 [shape = 'f32[1,1]{1,0:T(1,128)S(1)}', space=vmem, size = 0x200, scoped, tag = 'scoped memory for tpu_custom_call.1']
  %s0 = inlined_call_operand.vmem [shape: f32[2,8,4], index: 0, kind: input, shape index: {}]
  %s1 = inlined_call_operand.vmem [shape: f32[4,32], index: 1, kind: input, shape index: {}]
  %s2 = inlined_call_operand.vmem [shape: f32[1,32], index: 2, kind: input, shape index: {}]
  %s3 = inlined_call_operand.vmem [shape: f32[32,16], index: 3, kind: input, shape index: {}]
  %s4 = inlined_call_operand.vmem [shape: f32[32,1], index: 4, kind: input, shape index: {}]
  %s5 = inlined_call_operand.<no memory space> [shape: f32[1,1], index: 5, kind: input, shape index: {}]
  %s6 = inlined_call_operand.vmem [shape: f32[2,1], index: 6, kind: output, shape index: {0}]
  %s7 = inlined_call_operand.hbm [shape: f32[2,1,128], index: 7, kind: output, shape index: {1}]
  %8 = xla_tuple %s6, %s7
  %s9 = sld [smem:[#allocation0]]
  $region42: #{tpu_custom_call.1} parent=0
    _
  %s11 = ssub.s32 1, %s9
  %s12 = scalar_select 0, %s11, %s9
  %v13 = vstv %s5
  %14 = vst [vmem:[#allocation2] sm:$0x1] %v13
  $region1: #{tpu_custom_call.1} parent=0
    #allocation3 [shape = 'u8[1024]{0}', space=vmem, size = 0x400, scoped, tag = 'output window, operand 1, single buffered']
    #allocation4 [shape = 's32[1]{0}', space=sflag, size = 0x4, scoped, tag = 'scoped memory for tpu_custom_call.1']
    %15 = vsyncpa [#allocation4], 0
    // Predicated region
    $region2: #{tpu_custom_call.1} parent=1 // pred_check
      _
    $region3: #{tpu_custom_call.1} parent=1 // pred_check_branch
      %17 = sbr.rel (0) target = $region5
    $region4: #{tpu_custom_call.1} parent=1 // pred_region
      _
    $region5: #{tpu_custom_call.1} parent=1 // pred_fallthru
      _
    // Predicated region
    $region6: #{tpu_custom_call.1} parent=1 // pred_check
      _
    $region7: #{tpu_custom_call.1} parent=1 // pred_check_branch
      %19 = sbr.rel (0) target = $region9
    $region8: #{tpu_custom_call.1} parent=1 // pred_region
      _
    $region9: #{tpu_custom_call.1} parent=1 // pred_fallthru
      _
    // Predicated region
    $region10: #{tpu_custom_call.1} parent=1 // pred_check
      _
    $region11: #{tpu_custom_call.1} parent=1 // pred_check_branch
      %21 = sbr.rel (0) target = $region13
    $region12: #{tpu_custom_call.1} parent=1 // pred_region
      _
    $region13: #{tpu_custom_call.1} parent=1 // pred_fallthru
      _
    // Predicated region
    $region14: #{tpu_custom_call.1} parent=1 // pred_check
      _
    $region15: #{tpu_custom_call.1} parent=1 // pred_check_branch
      %23 = sbr.rel (0) target = $region17
    $region16: #{tpu_custom_call.1} parent=1 // pred_region
      _
    $region17: #{tpu_custom_call.1} parent=1 // pred_fallthru
      _
    // Predicated region
    $region18: #{tpu_custom_call.1} parent=1 // pred_check
      _
    $region19: #{tpu_custom_call.1} parent=1 // pred_check_branch
      %25 = sbr.rel (0) target = $region21
    $region20: #{tpu_custom_call.1} parent=1 // pred_region
      _
    $region21: #{tpu_custom_call.1} parent=1 // pred_fallthru
      _
    // Predicated region
    $region22: #{tpu_custom_call.1} parent=1 // pred_check
      _
    $region23: #{tpu_custom_call.1} parent=1 // pred_check_branch
      %27 = sbr.rel (0) target = $region25
    $region24: #{tpu_custom_call.1} parent=1 // pred_region
      _
    $region25: #{tpu_custom_call.1} parent=1 // pred_fallthru
      _
    %v28 = vld [vmem:[%s0] sm:$0xff]
    %v29 = vld [vmem:[%s0 + $0x8] sm:$0xff]
    %v30 = vld [vmem:[%s1] sm:$0xf]
    %v31 = vld [vmem:[%s2] sm:$0x1]
    %v33 = vperm.slane %v31, 0
    %vm35 = vcmask 31744
    %v37 = vsel %vm35, %v28, 0
    %v40 = vsel %vm35, %v29, 0
    %vm42 = vcmask 1043456
    %v44 = vsel %vm42, %v30, 0
    %46 = vmatpush.msra.mxu0 0.0
    %47 = vmatpush.msra.mxu0 0.0
    %48 = vmatpush.msra.mxu0 0.0
    %49 = vmatpush.msra.mxu0 0.0
    %50 = vmatpush.msra.mxu0 0.0
    %51 = vmatpush.msra.mxu0 0.0
    %52 = vmatpush.msra.mxu0 0.0
    %53 = vmatpush.msra.mxu0 0.0
    %54 = vmatpush.msra.mxu0 0.0
    %55 = vmatpush.msra.mxu0 0.0
    %56 = vmatpush.msra.mxu0 0.0
    %57 = vmatpush.msra.mxu0 0.0
    %58 = vmatpush.msra.mxu0 0.0
    %59 = vmatpush.msra.mxu0 0.0
    %60 = vmatpush.msra.mxu0 0.0
    %61 = vmatpush.msra.mxu0 %v44
    %62 = vmatmul.f32.gmra.mxu0 %v37
    %v63 = vpop.f32.mrf.mxu0
    %v64 = vadd.f32 %v33, %v63
    %65 = vmatmul.f32.gmra.mxu0 %v40
    %v66 = vpop.f32.mrf.mxu0
    %v67 = vadd.f32 %v33, %v66
    %68 = vdwg.mxu0
    %v69 = vmax.f32 %v64, 0.0
    %v70 = vmax.f32 %v67, 0.0
    %v71 = vld [vmem:[%s3] sm:$0xff]
    %v72 = vld [vmem:[%s3 + $0x8] sm:$0xff]
    %v73 = vld [vmem:[%s3 + $0x10] sm:$0xff]
    %v74 = vld [vmem:[%s3 + $0x18] sm:$0xff]
    %vm75 = vcmask 261120
    %v77 = vsel %vm75, %v69, 0
    %v80 = vsel %vm75, %v70, 0
    %82 = vmatpush.msra.mxu0 0.0
    %83 = vmatpush.msra.mxu0 0.0
    %84 = vmatpush.msra.mxu0 0.0
    %85 = vmatpush.msra.mxu0 0.0
    %86 = vmatpush.msra.mxu0 0.0
    %87 = vmatpush.msra.mxu0 0.0
    %88 = vmatpush.msra.mxu0 0.0
    %89 = vmatpush.msra.mxu0 0.0
    %90 = vmatpush.msra.mxu0 0.0
    %91 = vmatpush.msra.mxu0 0.0
    %92 = vmatpush.msra.mxu0 0.0
    %93 = vmatpush.msra.mxu0 0.0
    %94 = vmatpush.msra.mxu0 %v74
    %95 = vmatpush.msra.mxu0 %v73
    %96 = vmatpush.msra.mxu0 %v72
    %97 = vmatpush.msra.mxu0 %v71
    %98 = vmatmul.f32.gmra.mxu0 %v77
    %v99 = vpop.f32.mrf.mxu0
    %v100 = vadd.f32 0.0, %v99
    %101 = vmatmul.f32.gmra.mxu0 %v80
    %v102 = vpop.f32.mrf.mxu0
    %v103 = vadd.f32 0.0, %v102
    %104 = vdwg.mxu0
    %v105 = vtanh.pop %v100
    %v106 = vtanh.pop %v103
    %vm107 = vcmask 130048
    %v108 = vsel %vm107, %v105, -inf
    %v109 = vrot.slane %v108, 4
    %v110 = vmax.f32 %v108, %v109
    %v111 = vrot.slane %v110, 2
    %v112 = vmax.f32 %v110, %v111
    %v113 = vrot.slane %v112, 1
    %v114 = vmax.f32 %v112, %v113
    %v115 = vsel %vm107, %v106, -inf
    %v116 = vrot.slane %v115, 4
    %v117 = vmax.f32 %v115, %v116
    %v118 = vrot.slane %v117, 2
    %v119 = vmax.f32 %v117, %v118
    %v120 = vrot.slane %v119, 1
    %v121 = vmax.f32 %v119, %v120
    %v122 = vsub.f32 %v105, %v114
    %v123 = vsub.f32 %v106, %v121
    %v124 = vmul.f32 %v122, 1.442695
    %v125 = vpow.pop %v124
    %v126 = vmul.f32 %v123, 1.442695
    %v127 = vpow.pop %v126
    %v128 = vsel %vm107, %v125, 0.0
    %v129 = vrot.slane %v128, 4
    %v130 = vadd.f32 %v128, %v129
    %v131 = vrot.slane %v130, 2
    %v132 = vadd.f32 %v130, %v131
    %v133 = vrot.slane %v132, 1
    %v134 = vadd.f32 %v132, %v133
    %v135 = vsel %vm107, %v127, 0.0
    %v136 = vrot.slane %v135, 4
    %v137 = vadd.f32 %v135, %v136
    %v138 = vrot.slane %v137, 2
    %v139 = vadd.f32 %v137, %v138
    %v140 = vrot.slane %v139, 1
    %v141 = vadd.f32 %v139, %v140
    %v142 = vrcp.pop %v134
    %v143 = vmul.f32 %v134, %v142
    %v144 = vsub.f32 1.0, %v143
    %v145 = vmul.f32 %v142, %v144
    %v146 = vadd.f32 %v142, %v145
    %vm147 = vweird.f32 %v134
    %vm148 = vweird.f32 %v142
    %vm149 = vmor %vm147, %vm148
    %v150 = vsel %vm149, %v142, %v146
    %v151 = vand.u32 2147483647, %v134
    %vm152 = vcmp.eq.f32.partialorder %v151, 8.507059e+37
    %v153 = vand.u32 %v134, 2147483648
    %v154 = vor.u32 1.1754944e-38, %v153
    %v155 = vsel %vm152, %v154, %v150
    %v156 = vrcp.pop %v141
    %v157 = vmul.f32 %v141, %v156
    %v158 = vsub.f32 1.0, %v157
    %v159 = vmul.f32 %v156, %v158
    %v160 = vadd.f32 %v156, %v159
    %vm161 = vweird.f32 %v141
    %vm162 = vweird.f32 %v156
    %vm163 = vmor %vm161, %vm162
    %v164 = vsel %vm163, %v156, %v160
    %v165 = vand.u32 2147483647, %v141
    %vm166 = vcmp.eq.f32.partialorder %v165, 8.507059e+37
    %v167 = vand.u32 %v141, 2147483648
    %v168 = vor.u32 1.1754944e-38, %v167
    %v169 = vsel %vm166, %v168, %v164
    %v170 = vmul.f32 %v125, %v155
    %v171 = vmul.f32 %v127, %v169
    %v174 = vrot.slane %v170, 1
    %v175 = vrot.slane %v171, 1
    %176 = vrot.lane.b32.xlu0 %v174, 16
    %v177 = vpop.permute.xlu0 %176
    %178 = vrot.lane.b32.xlu0 %v175, 16
    %v179 = vpop.permute.xlu0 %178
    %v182 = vrot.slane %v170, 2
    %v183 = vrot.slane %v171, 2
    %184 = vrot.lane.b32.xlu0 %v182, 32
    %v185 = vpop.permute.xlu0 %184
    %186 = vrot.lane.b32.xlu0 %v183, 32
    %v187 = vpop.permute.xlu0 %186
    %v190 = vrot.slane %v170, 3
    %v191 = vrot.slane %v171, 3
    %192 = vrot.lane.b32.xlu0 %v190, 48
    %v193 = vpop.permute.xlu0 %192
    %194 = vrot.lane.b32.xlu0 %v191, 48
    %v195 = vpop.permute.xlu0 %194
    %v198 = vrot.slane %v170, 4
    %v199 = vrot.slane %v171, 4
    %200 = vrot.lane.b32.xlu0 %v198, 64
    %v201 = vpop.permute.xlu0 %200
    %202 = vrot.lane.b32.xlu0 %v199, 64
    %v203 = vpop.permute.xlu0 %202
    %v206 = vrot.slane %v170, 5
    %v207 = vrot.slane %v171, 5
    %208 = vrot.lane.b32.xlu0 %v206, 80
    %v209 = vpop.permute.xlu0 %208
    %210 = vrot.lane.b32.xlu0 %v207, 80
    %v211 = vpop.permute.xlu0 %210
    %v214 = vrot.slane %v170, 6
    %v215 = vrot.slane %v171, 6
    %216 = vrot.lane.b32.xlu0 %v214, 96
    %v217 = vpop.permute.xlu0 %216
    %218 = vrot.lane.b32.xlu0 %v215, 96
    %v219 = vpop.permute.xlu0 %218
    %v222 = vrot.slane %v170, 7
    %v223 = vrot.slane %v171, 7
    %224 = vrot.lane.b32.xlu0 %v222, 112
    %v225 = vpop.permute.xlu0 %224
    %226 = vrot.lane.b32.xlu0 %v223, 112
    %v227 = vpop.permute.xlu0 %226
    %v230 = vsel %vm107, %v170, %v177
    %v231 = vsel %vm107, %v171, %v179
    %v232 = vsel %vm75, %v230, %v185
    %v233 = vsel %vm75, %v231, %v187
    %vm234 = vcmask 392192
    %v235 = vsel %vm234, %v232, %v193
    %v236 = vsel %vm234, %v233, %v195
    %vm237 = vcmask 523264
    %v238 = vsel %vm237, %v235, %v201
    %v239 = vsel %vm237, %v236, %v203
    %vm240 = vcmask 654336
    %v241 = vsel %vm240, %v238, %v209
    %v242 = vsel %vm240, %v239, %v211
    %vm243 = vcmask 785408
    %v244 = vsel %vm243, %v241, %v217
    %v245 = vsel %vm243, %v242, %v219
    %vm246 = vcmask 916480
    %v247 = vsel %vm246, %v244, %v225
    %v248 = vsel %vm246, %v245, %v227
    %249 = vst [vmem:[#allocation3] sm:$0x1] %v247
    %250 = vst [vmem:[#allocation3 + $0x1] sm:$0x1] %v248
    %v251 = vsel %vm107, %v170, 0.0
    %252 = vadd.xlane.f32.xlu0 %v251
    %v253 = vpop.xlane.xlu0 %252
    %v254 = vsel %vm107, %v171, 0.0
    %255 = vadd.xlane.f32.xlu0 %v254
    %v256 = vpop.xlane.xlu0 %255
    %v257 = vmul.f32 %v253, %v69
    %v258 = vmul.f32 %v256, %v70
    %v259 = vsel %vm75, %v257, 0.0
    %v260 = vrot.slane %v259, 4
    %v261 = vadd.f32 %v259, %v260
    %v262 = vrot.slane %v261, 2
    %v263 = vadd.f32 %v261, %v262
    %v264 = vrot.slane %v263, 1
    %v265 = vadd.f32 %v263, %v264
    %v266 = vsel %vm75, %v258, 0.0
    %v267 = vrot.slane %v266, 4
    %v268 = vadd.f32 %v266, %v267
    %v269 = vrot.slane %v268, 2
    %v270 = vadd.f32 %v268, %v269
    %v271 = vrot.slane %v270, 1
    %v272 = vadd.f32 %v270, %v271
    %v273 = vld [vmem:[%s4] sm:$0xff]
    %v274 = vld [vmem:[%s4 + $0x8] sm:$0xff]
    %v275 = vld [vmem:[%s4 + $0x10] sm:$0xff]
    %v276 = vld [vmem:[%s4 + $0x18] sm:$0xff]
    %v277 = vld [vmem:[#allocation2] sm:$0x1]
    %v279 = vperm.slane %v277, 0
    %vm283 = vcmask 1041409
    %v284 = vsel %vm283, %v272, %v265
    %v285 = vsel %vm75, %v284, 0
    %287 = vmatpush.msra.mxu0 0.0
    %288 = vmatpush.msra.mxu0 0.0
    %289 = vmatpush.msra.mxu0 0.0
    %290 = vmatpush.msra.mxu0 0.0
    %291 = vmatpush.msra.mxu0 0.0
    %292 = vmatpush.msra.mxu0 0.0
    %293 = vmatpush.msra.mxu0 0.0
    %294 = vmatpush.msra.mxu0 0.0
    %295 = vmatpush.msra.mxu0 0.0
    %296 = vmatpush.msra.mxu0 0.0
    %297 = vmatpush.msra.mxu0 0.0
    %298 = vmatpush.msra.mxu0 0.0
    %299 = vmatpush.msra.mxu0 %v276
    %300 = vmatpush.msra.mxu0 %v275
    %301 = vmatpush.msra.mxu0 %v274
    %302 = vmatpush.msra.mxu0 %v273
    %303 = vmatmul.f32.gmra.mxu0 %v285
    %v304 = vpop.f32.mrf.mxu0
    %v305 = vadd.f32 %v279, %v304
    %306 = vdwg.mxu0
    %vm307 = vcmask 1024
    %308 = vst.msk [vmem:[%s6] sm:$0x3] %vm307, %v305
    // Predicated region
    $region26: #{tpu_custom_call.1} parent=1 // pred_check
      _
    $region27: #{tpu_custom_call.1} parent=1 // pred_check_branch
      %310 = sbr.rel (0) target = $region29
    $region28: #{tpu_custom_call.1} parent=1 // pred_region
      _
    $region29: #{tpu_custom_call.1} parent=1 // pred_fallthru
      _
    // Predicated region
    $region30: #{tpu_custom_call.1} parent=1 // pred_check
      _
    $region31: #{tpu_custom_call.1} parent=1 // pred_check_branch
      %312 = sbr.rel (0) target = $region33
    $region32: #{tpu_custom_call.1} parent=1 // pred_region
      %314 = vsyncadd [#allocation4], 0
      %s315 = sshll.u32 [#allocation3], 4
      %s316 = int_to_ptr.vmem [resolvable:$true] %s315
      %s317 = sshll.u32 %s7, 4
      %s318 = int_to_ptr.hbm [resolvable:$true] %s317
      %323 = dma.vmem_to_hbm [thread:$0]  %s316, 32, %s318, [#allocation4], 16, 16, 1
    $region33: #{tpu_custom_call.1} parent=1 // pred_fallthru
      _
    // Predicated region
    $region34: #{tpu_custom_call.1} parent=1 // pred_check
      _
    $region35: #{tpu_custom_call.1} parent=1 // pred_check_branch
      %325 = sbr.rel (0) target = $region37
    $region36: #{tpu_custom_call.1} parent=1 // pred_region
      _
    $region37: #{tpu_custom_call.1} parent=1 // pred_fallthru
      _
    // Predicated region
    $region38: #{tpu_custom_call.1} parent=1 // pred_check
      _
    $region39: #{tpu_custom_call.1} parent=1 // pred_check_branch
      %327 = sbr.rel (0) target = $region41
    $region40: #{tpu_custom_call.1} parent=1 // pred_region
      %329 = dma.done [#allocation4], 32
    $region41: #{tpu_custom_call.1} parent=1 // pred_fallthru
      _
    %330 = vsyncpa [#allocation4], 1

</llo_original>
